<compile_context>
chip_gen: v6e
topology: v6e:2x2x1
jax: 0.10.0
libtpu: 0.0.40
codegen_flags: <defaults>
</compile_context>

<pallas_src>
import functools

import jax
import jax.numpy as jnp
from jax.experimental import pallas as pl
from jax.experimental.pallas import tpu as pltpu


def _round_up(a: int, m: int) -> int:
    return ((a + m - 1) // m) * m


def _block_spec(shape, index_map, *, single_buffer=False):
    """BlockSpec helper; Buffered(1) for grid-invariant operands (no dead 2nd buffer)."""
    if single_buffer:
        try:
            return pl.BlockSpec(shape, index_map, pipeline_mode=pl.Buffered(1))
        except Exception:  # older jax without pipeline_mode -> default buffering
            pass
    return pl.BlockSpec(shape, index_map)


def _residual_kernel(x_ref, alpha_ref, beta_ref, w_ref, b_ref, o_ref, normed_ref, *,
                     eps: float, f_valid: int, col_tile: int):
    """One (row-tile i, col-tile j) grid step.

    x_ref:      (TR, Fp)  resident across the column axis (index_map (i, 0))
    w_ref:      (Fp, TN)  column tile of the sublayer weight (bf16)
    b_ref:      (1, TN)   column tile of the sublayer bias (f32)
    normed_ref: (TR, Fp)  bf16 scratch holding LayerNorm(x) for the current row tile
    o_ref:      (TR, TN)

    Invariant: padded feature lanes of x (lanes >= f_valid) are exactly zero in HBM
    (the wrapper zero-pads x whenever Fp != F), so the plain sum / f_valid below is
    the exact mean over the valid lanes.
    """
    j = pl.program_id(1)
    fp = x_ref.shape[-1]

    # --- LayerNorm once per row tile, reused across all column tiles ---
    @pl.when(j == 0)
    def _():
        x = x_ref[...].astype(jnp.float32)
        mean = jnp.sum(x, axis=-1, keepdims=True) * (1.0 / f_valid)
        centered = x - mean
        if f_valid < fp:
            lane = jax.lax.broadcasted_iota(jnp.int32, centered.shape, dimension=1)
            centered = jnp.where(lane < f_valid, centered, 0.0)
        # torch.Tensor.std semantics: unbiased (N-1), eps added to std (not var).
        var = jnp.sum(centered * centered, axis=-1, keepdims=True) * (1.0 / (f_valid - 1))
        inv = pl.reciprocal(jnp.sqrt(var) + eps, approx=True)        # EUP slot
        # alpha/beta are zero in padded lanes -> padded lanes of `normed` are 0.
        normed_ref[...] = (alpha_ref[...] * centered * inv
                           + beta_ref[...]).astype(normed_ref.dtype)

    # --- sublayer: Linear(F, F) column tile on the MXU (bf16 x bf16 -> f32 acc) ---
    y = jnp.dot(normed_ref[...], w_ref[...],
                preferred_element_type=jnp.float32) + b_ref[...]

    # --- dropout (eval mode => identity) + residual add ---
    if col_tile == fp:
        x_cols = x_ref[...]
    else:
        start = pl.multiple_of(j * col_tile, 128)
        x_cols = x_ref[:, pl.ds(start, col_tile)]
    o_ref[...] = (x_cols.astype(jnp.float32) + y).astype(o_ref.dtype)


def prepare_params(alpha, beta, w, b, *, matmul_dtype=jnp.bfloat16):
    """Pad params to a lane-dense feature width and cast W once (not per call)."""
    F = w.shape[0]
    Fp = _round_up(F, 128)
    pad = Fp - F
    alpha_p = jnp.pad(alpha.astype(jnp.float32), (0, pad)).reshape(1, Fp)
    beta_p = jnp.pad(beta.astype(jnp.float32), (0, pad)).reshape(1, Fp)
    w_p = jnp.pad(w, ((0, pad), (0, pad))).astype(matmul_dtype)
    b_p = jnp.pad(b.astype(jnp.float32), (0, pad)).reshape(1, Fp)
    return alpha_p, beta_p, w_p, b_p


def residual_connection(x, params, *, eps: float = 1e-6):
    """x: [B, S, F]; params = prepare_params(alpha, beta, w, b)."""
    alpha_p, beta_p, w_p, b_p = params
    B, S, F = x.shape
    assert F > 1, "unbiased std requires features > 1"
    Fp = w_p.shape[0]
    R = B * S

    # --- adaptive row tile: ~2 MiB of f32 x per tile; keep several grid steps ---
    TR = max(8, (2 * 1024 * 1024) // (Fp * 4))
    TR = min(TR, 4096)
    if R >= 4 * 8:                                   # >=4 row steps when rows allow
        TR = min(TR, _round_up((R + 3) // 4, 8))
    TR = min(_round_up(TR, 8), _round_up(R, 8))
    R_pad = _round_up(R, TR)
    grid_m = R_pad // TR

    # --- W tiling: fully resident (single buffer) while it fits ~16 MiB, else
    #     sweep (Fp, TN) column tiles on a second "arbitrary" grid axis. ---
    w_itemsize = jnp.dtype(w_p.dtype).itemsize
    if Fp * Fp * w_itemsize <= 16 * 1024 * 1024:
        TN = Fp
    else:
        TN = 512
        while Fp % TN != 0:
            TN -= 128
    grid_n = Fp // TN
    resident_w = (TN == Fp)

    # --- avoid extra wrapper-side HBM passes when the layout already fits ---
    x2 = x.reshape(R, F)
    needs_pad = (Fp != F) or (R_pad != R)
    if needs_pad:
        x2 = jnp.pad(x2, ((0, R_pad - R), (0, Fp - F)))   # zero-pad (LN invariant)

    kernel = functools.partial(_residual_kernel, eps=eps, f_valid=F, col_tile=TN)

    # --- VMEM budget from the actual tile footprint (+ f32 temporaries headroom) ---
    x_itemsize = jnp.dtype(x.dtype).itemsize
    vmem_needed = (
        2 * TR * Fp * x_itemsize                       # x (double-buffered)
        + 2 * TR * TN * x_itemsize                     # out (double-buffered)
        + (1 if resident_w else 2) * Fp * TN * w_itemsize   # W tile(s)
        + TR * Fp * w_itemsize                         # LN scratch (bf16)
        + 5 * TR * Fp * 4                              # in-kernel f32 temporaries
        + 8 * Fp * 4                                   # alpha/beta/b
    )
    vmem_limit = min(96 * 1024 * 1024,
                     max(32 * 1024 * 1024, int(vmem_needed * 3 // 2)))

    cost = pl.CostEstimate(
        flops=2 * R_pad * Fp * Fp + 10 * R_pad * Fp,
        transcendentals=2 * R_pad,
        bytes_accessed=2 * R_pad * Fp * x_itemsize
        + (1 if resident_w else grid_m) * Fp * Fp * w_itemsize + 3 * Fp * 4,
    )

    out2 = pl.pallas_call(
        kernel,
        out_shape=jax.ShapeDtypeStruct((R_pad, Fp), x.dtype),
        grid_spec=pltpu.PrefetchScalarGridSpec(
            num_scalar_prefetch=0,
            grid=(grid_m, grid_n),
            in_specs=[
                _block_spec((TR, Fp), lambda i, j: (i, 0)),                       # x
                _block_spec((1, Fp), lambda i, j: (0, 0), single_buffer=True),    # alpha
                _block_spec((1, Fp), lambda i, j: (0, 0), single_buffer=True),    # beta
                _block_spec((Fp, TN), lambda i, j: (0, j), single_buffer=resident_w),  # W
                _block_spec((1, TN), lambda i, j: (0, j), single_buffer=resident_w),   # b
            ],
            out_specs=pl.BlockSpec((TR, TN), lambda i, j: (i, j)),
            scratch_shapes=[pltpu.VMEM((TR, Fp), w_p.dtype)],   # LN(x) in bf16
        ),
        compiler_params=pltpu.CompilerParams(
            dimension_semantics=("parallel", "arbitrary"),
            vmem_limit_bytes=vmem_limit,
        ),
        cost_estimate=cost,
    )(x2, alpha_p, beta_p, w_p, b_p)

    if needs_pad:
        out2 = out2[:R, :F]
    return out2.reshape(B, S, F)


if __name__ == "__main__":
    B, S, F = 2, 8, 32
    key = jax.random.PRNGKey(0)
    kx, kw, kb = jax.random.split(key, 3)

    x = jax.random.normal(kx, (B, S, F), dtype=jnp.float32)

    # Module parameters (LayerNormalization.__init__ shapes) + concrete sublayer.
    alpha = jnp.ones((F,), dtype=jnp.float32)      # LayerNormalization.alpha
    beta = jnp.zeros((F,), dtype=jnp.float32)      # LayerNormalization.bias
    w = jax.random.normal(kw, (F, F), dtype=jnp.float32) * 0.05   # Linear(F, F) weight
    b = jax.random.normal(kb, (F,), dtype=jnp.float32) * 0.05     # Linear(F, F) bias

    params = prepare_params(alpha, beta, w, b)     # pad / cast once, outside the call
    out = residual_connection(x, params)
    jax.block_until_ready(out)

    # Pure-JAX f32 reference (torch semantics). Kernel uses bf16 MXU operands and
    # an EUP approx reciprocal -> compare with modest tolerance.
    mean = jnp.mean(x, axis=-1, keepdims=True)
    cen = x - mean
    std = jnp.sqrt(jnp.sum(cen * cen, axis=-1, keepdims=True) / (F - 1))
    normed = alpha * cen / (std + 1e-6) + beta
    ref = x + (jnp.einsum("bsf,fg->bsg", normed, w) + b)
    err = float(jnp.max(jnp.abs(out - ref)))
    assert jnp.allclose(out, ref, atol=5e-2, rtol=5e-2), f"max abs err={err}"

    print("KERNEL_OK")
</pallas_src>

<mosaic_0001>
module attributes {stable_mosaic.version = 11 : i64} {
  func.func @_residual_kernel(%arg0: i32, %arg1: i32, %arg2: memref<16x128xf32, #tpu.memory_space<vmem>>, %arg3: memref<1x128xf32, #tpu.memory_space<vmem>>, %arg4: memref<1x128xf32, #tpu.memory_space<vmem>>, %arg5: memref<128x128xbf16, #tpu.memory_space<vmem>>, %arg6: memref<1x128xf32, #tpu.memory_space<vmem>>, %arg7: memref<16x128xf32, #tpu.memory_space<vmem>>, %arg8: memref<16x128xbf16, #tpu.memory_space<vmem>>) attributes {dimension_semantics = [#tpu.dimension_semantics<parallel>, #tpu.dimension_semantics<arbitrary>], iteration_bounds = array<i64: 1, 1>, scalar_prefetch = 0 : i64, scratch_operands = 1 : i64, tpu.core_type = #tpu.core_type<tc>, window_params = [{transform_indices = @transform_0, window_bounds = array<i64: 16, 128>}, {pipeline_mode = #tpu.pipeline_mode<synchronous>, transform_indices = @transform_1, window_bounds = array<i64: 1, 128>}, {pipeline_mode = #tpu.pipeline_mode<synchronous>, transform_indices = @transform_2, window_bounds = array<i64: 1, 128>}, {pipeline_mode = #tpu.pipeline_mode<synchronous>, transform_indices = @transform_3, window_bounds = array<i64: 128, 128>}, {pipeline_mode = #tpu.pipeline_mode<synchronous>, transform_indices = @transform_4, window_bounds = array<i64: 1, 128>}, {transform_indices = @transform_5, window_bounds = array<i64: 16, 128>}]} {
    %c0_i32 = arith.constant 0 : i32
    %0 = arith.cmpi eq, %arg1, %c0_i32 : i32
    %1 = arith.extui %0 : i1 to i32
    %c0_i32_0 = arith.constant 0 : i32
    %2 = arith.cmpi ne, %1, %c0_i32_0 : i32
    scf.if %2 {
      %c0_10 = arith.constant 0 : index
      %c0_11 = arith.constant 0 : index
      %12 = vector.load %arg2[%c0_10, %c0_11] : memref<16x128xf32, #tpu.memory_space<vmem>>, vector<16x128xf32>
      %cst_12 = arith.constant dense<0.000000e+00> : vector<16xf32>
      %13 = vector.multi_reduction <add>, %12, %cst_12 [1] : vector<16x128xf32> to vector<16xf32>
      %14 = vector.shape_cast %13 : vector<16xf32> to vector<16x1xf32>
      %cst_13 = arith.constant 3.125000e-02 : f32
      %15 = vector.broadcast %cst_13 : f32 to vector<16x1xf32>
      %16 = arith.mulf %14, %15 : vector<16x1xf32>
      %17 = vector.broadcast %16 : vector<16x1xf32> to vector<16x128xf32>
      %18 = arith.subf %12, %17 : vector<16x128xf32>
      %19 = tpu.iota {dimensions = array<i32: 1>} : vector<16x128xi32>
      %c32_i32 = arith.constant 32 : i32
      %20 = vector.broadcast %c32_i32 : i32 to vector<16x128xi32>
      %21 = arith.cmpi slt, %19, %20 : vector<16x128xi32>
      %cst_14 = arith.constant 0.000000e+00 : f32
      %22 = vector.broadcast %cst_14 : f32 to vector<16x128xf32>
      %23 = arith.select %21, %18, %22 : vector<16x128xi1>, vector<16x128xf32>
      %24 = arith.mulf %23, %23 : vector<16x128xf32>
      %cst_15 = arith.constant dense<0.000000e+00> : vector<16xf32>
      %25 = vector.multi_reduction <add>, %24, %cst_15 [1] : vector<16x128xf32> to vector<16xf32>
      %26 = vector.shape_cast %25 : vector<16xf32> to vector<16x1xf32>
      %cst_16 = arith.constant 0.0322580636 : f32
      %27 = vector.broadcast %cst_16 : f32 to vector<16x1xf32>
      %28 = arith.mulf %26, %27 : vector<16x1xf32>
      %29 = math.sqrt %28 : vector<16x1xf32>
      %cst_17 = arith.constant 9.99999997E-7 : f32
      %30 = vector.broadcast %cst_17 : f32 to vector<16x1xf32>
      %31 = arith.addf %29, %30 : vector<16x1xf32>
      %32 = tpu.reciprocal %31 {approx = true} : vector<16x1xf32> -> vector<16x1xf32>
      %c0_18 = arith.constant 0 : index
      %c0_19 = arith.constant 0 : index
      %33 = vector.load %arg3[%c0_18, %c0_19] : memref<1x128xf32, #tpu.memory_space<vmem>>, vector<1x128xf32>
      %34 = vector.broadcast %33 : vector<1x128xf32> to vector<16x128xf32>
      %35 = arith.mulf %34, %23 : vector<16x128xf32>
      %36 = vector.broadcast %32 : vector<16x1xf32> to vector<16x128xf32>
      %37 = arith.mulf %35, %36 : vector<16x128xf32>
      %c0_20 = arith.constant 0 : index
      %c0_21 = arith.constant 0 : index
      %38 = vector.load %arg4[%c0_20, %c0_21] : memref<1x128xf32, #tpu.memory_space<vmem>>, vector<1x128xf32>
      %39 = vector.broadcast %38 : vector<1x128xf32> to vector<16x128xf32>
      %40 = arith.addf %37, %39 : vector<16x128xf32>
      %41 = arith.truncf %40 : vector<16x128xf32> to vector<16x128xbf16>
      %c0_22 = arith.constant 0 : index
      %c0_23 = arith.constant 0 : index
      %42 = vector.load %arg8[%c0_22, %c0_23] : memref<16x128xbf16, #tpu.memory_space<vmem>>, vector<16x128xbf16>
      tpu.vector_store %arg8[%c0_22, %c0_23], %41 {strides = array<i32>} : memref<16x128xbf16, #tpu.memory_space<vmem>>, vector<16x128xbf16>,
    } else {
    }
    %c0 = arith.constant 0 : index
    %c0_1 = arith.constant 0 : index
    %3 = vector.load %arg8[%c0, %c0_1] : memref<16x128xbf16, #tpu.memory_space<vmem>>, vector<16x128xbf16>
    %c0_2 = arith.constant 0 : index
    %c0_3 = arith.constant 0 : index
    %4 = vector.load %arg5[%c0_2, %c0_3] : memref<128x128xbf16, #tpu.memory_space<vmem>>, vector<128x128xbf16>
    %cst = arith.constant dense<0.000000e+00> : vector<16x128xf32>
    %5 = tpu.matmul %3, %4, %cst {dimension_numbers = #tpu.dot_dimension_numbers<[1], [0], [0], [1], [0, 0, 1, 1], [], []>} : vector<16x128xbf16>, vector<128x128xbf16>, vector<16x128xf32> -> vector<16x128xf32>
    %c0_4 = arith.constant 0 : index
    %c0_5 = arith.constant 0 : index
    %6 = vector.load %arg6[%c0_4, %c0_5] : memref<1x128xf32, #tpu.memory_space<vmem>>, vector<1x128xf32>
    %7 = vector.broadcast %6 : vector<1x128xf32> to vector<16x128xf32>
    %8 = arith.addf %5, %7 : vector<16x128xf32>
    %c0_6 = arith.constant 0 : index
    %c0_7 = arith.constant 0 : index
    %9 = vector.load %arg2[%c0_6, %c0_7] : memref<16x128xf32, #tpu.memory_space<vmem>>, vector<16x128xf32>
    %10 = arith.addf %9, %8 : vector<16x128xf32>
    %c0_8 = arith.constant 0 : index
    %c0_9 = arith.constant 0 : index
    %11 = vector.load %arg7[%c0_8, %c0_9] : memref<16x128xf32, #tpu.memory_space<vmem>>, vector<16x128xf32>
    tpu.vector_store %arg7[%c0_8, %c0_9], %10 {strides = array<i32>} : memref<16x128xf32, #tpu.memory_space<vmem>>, vector<16x128xf32>,
    return
  }
  func.func @transform_0(%arg0: i32, %arg1: i32) -> (i32, i32) {
    %c0_i32 = arith.constant 0 : i32
    %c0_i32_0 = arith.constant 0 : i32
    return %arg0, %c0_i32 : i32, i32
  }
  func.func @transform_1(%arg0: i32, %arg1: i32) -> (i32, i32) {
    %c0_i32 = arith.constant 0 : i32
    %c0_i32_0 = arith.constant 0 : i32
    %c0_i32_1 = arith.constant 0 : i32
    return %c0_i32, %c0_i32_0 : i32, i32
  }
  func.func @transform_2(%arg0: i32, %arg1: i32) -> (i32, i32) {
    %c0_i32 = arith.constant 0 : i32
    %c0_i32_0 = arith.constant 0 : i32
    %c0_i32_1 = arith.constant 0 : i32
    return %c0_i32, %c0_i32_0 : i32, i32
  }
  func.func @transform_3(%arg0: i32, %arg1: i32) -> (i32, i32) {
    %c0_i32 = arith.constant 0 : i32
    %c0_i32_0 = arith.constant 0 : i32
    return %c0_i32, %arg1 : i32, i32
  }
  func.func @transform_4(%arg0: i32, %arg1: i32) -> (i32, i32) {
    %c0_i32 = arith.constant 0 : i32
    %c0_i32_0 = arith.constant 0 : i32
    return %c0_i32, %arg1 : i32, i32
  }
  func.func @transform_5(%arg0: i32, %arg1: i32) -> (i32, i32) {
    %c0_i32 = arith.constant 0 : i32
    return %arg0, %arg1 : i32, i32
  }
}

</mosaic_0001>

<llo_original>
// kernel: tpu_custom_call.1
$region0: #{tpu_custom_call.1}
  #allocation0 [shape = 'u32[]', space=smem, size = 0x4, offset = 0x4, fixed_abs, tag = 'smem constant byte address 0x4 - core index']
  #allocation1 [shape = 'u32[144,128]{1,0:T(1,128)}', space=vmem, size = 0x12000, scoped, tag = 'internal scratch']
  #allocation2 [shape = 'bf16[16,128]{1,0:T(8,128)(2,1)}', space=vmem, size = 0x1000, scoped, tag = 'scratch operand']
  %s0 = inlined_call_operand.hbm [shape: f32[16,128], index: 0, kind: input, shape index: {}]
  %s1 = inlined_call_operand.vmem [shape: f32[1,128], index: 1, kind: input, shape index: {}]
  %s2 = inlined_call_operand.vmem [shape: f32[1,128], index: 2, kind: input, shape index: {}]
  %s3 = inlined_call_operand.hbm [shape: bf16[128,128], index: 3, kind: input, shape index: {}]
  %s4 = inlined_call_operand.vmem [shape: f32[1,128], index: 4, kind: input, shape index: {}]
  %s5 = inlined_call_operand.hbm [shape: f32[16,128], index: 5, kind: output, shape index: {}]
  %s6 = sld [smem:[#allocation0]]
  $region42: #{tpu_custom_call.1} parent=0
    _
  %s8 = ssub.s32 1, %s6
  %s9 = scalar_select 0, %s8, %s6
  $region1: #{tpu_custom_call.1} parent=0
    #allocation3 [shape = 'u8[8192]{0}', space=vmem, size = 0x2000, scoped, tag = 'input window, operand 0, single buffered']
    #allocation4 [shape = 's32[1]{0}', space=sflag, size = 0x4, scoped, tag = 'scoped memory for tpu_custom_call.1']
    #allocation5 [shape = 's32[1]{0}', space=sflag, size = 0x4, scoped, tag = 'scoped memory for tpu_custom_call.1']
    #allocation6 [shape = 'u8[32768]{0}', space=vmem, size = 0x8000, scoped, tag = 'input window, operand 3, single buffered']
    #allocation7 [shape = 's32[1]{0}', space=sflag, size = 0x4, scoped, tag = 'scoped memory for tpu_custom_call.1']
    #allocation8 [shape = 'u8[8192]{0}', space=vmem, size = 0x2000, scoped, tag = 'output window, operand 0, single buffered']
    %10 = vsyncpa [#allocation4], 0
    %11 = vsyncpa [#allocation7], 0
    %12 = vsyncpa [#allocation5], 0
    // Predicated region
    $region2: #{tpu_custom_call.1} parent=1 // pred_check
      _
    $region3: #{tpu_custom_call.1} parent=1 // pred_check_branch
      %14 = sbr.rel (0) target = $region5
    $region4: #{tpu_custom_call.1} parent=1 // pred_region
      %s16 = ssub.s32 256, 256
      %17 = vsyncadd [#allocation4], %s16
      %s18 = sshll.u32 [#allocation3], 4
      %s19 = int_to_ptr.vmem [resolvable:$true] %s18
      %24 = dma.hbm_to_vmem [thread:$0]  %s0, 256, %s19, [#allocation4], 128, 128, 8
    $region5: #{tpu_custom_call.1} parent=1 // pred_fallthru
      _
    // Predicated region
    $region6: #{tpu_custom_call.1} parent=1 // pred_check
      _
    $region7: #{tpu_custom_call.1} parent=1 // pred_check_branch
      %26 = sbr.rel (0) target = $region9
    $region8: #{tpu_custom_call.1} parent=1 // pred_region
      _
    $region9: #{tpu_custom_call.1} parent=1 // pred_fallthru
      _
    // Predicated region
    $region10: #{tpu_custom_call.1} parent=1 // pred_check
      _
    $region11: #{tpu_custom_call.1} parent=1 // pred_check_branch
      %28 = sbr.rel (0) target = $region13
    $region12: #{tpu_custom_call.1} parent=1 // pred_region
      _
    $region13: #{tpu_custom_call.1} parent=1 // pred_fallthru
      _
    // Predicated region
    $region14: #{tpu_custom_call.1} parent=1 // pred_check
      _
    $region15: #{tpu_custom_call.1} parent=1 // pred_check_branch
      %30 = sbr.rel (0) target = $region17
    $region16: #{tpu_custom_call.1} parent=1 // pred_region
      %s32 = ssub.s32 1024, 1024
      %33 = vsyncadd [#allocation7], %s32
      %s34 = sshll.u32 [#allocation6], 4
      %s35 = int_to_ptr.vmem [resolvable:$true] %s34
      %40 = dma.hbm_to_vmem [thread:$0]  %s3, 1024, %s35, [#allocation7], 64, 64, 4
    $region17: #{tpu_custom_call.1} parent=1 // pred_fallthru
      _
    // Predicated region
    $region18: #{tpu_custom_call.1} parent=1 // pred_check
      _
    $region19: #{tpu_custom_call.1} parent=1 // pred_check_branch
      %42 = sbr.rel (0) target = $region21
    $region20: #{tpu_custom_call.1} parent=1 // pred_region
      _
    $region21: #{tpu_custom_call.1} parent=1 // pred_fallthru
      _
    // Predicated region
    $region22: #{tpu_custom_call.1} parent=1 // pred_check
      _
    $region23: #{tpu_custom_call.1} parent=1 // pred_check_branch
      %44 = sbr.rel (0) target = $region25
    $region24: #{tpu_custom_call.1} parent=1 // pred_region
      %45 = dma.done [#allocation4], 256
    $region25: #{tpu_custom_call.1} parent=1 // pred_fallthru
      _
    // Predicated region
    $region26: #{tpu_custom_call.1} parent=1 // pred_check
      _
    $region27: #{tpu_custom_call.1} parent=1 // pred_check_branch
      %47 = sbr.rel (0) target = $region29
    $region28: #{tpu_custom_call.1} parent=1 // pred_region
      %48 = dma.done [#allocation7], 1024
    $region29: #{tpu_custom_call.1} parent=1 // pred_fallthru
      _
    %p50 = scmp.eq.s32.totalorder 0, 0
    // Predicated region
    $region30: #{tpu_custom_call.1} parent=1 // pred_check
      %p51 = pneg %p50
    $region31: #{tpu_custom_call.1} parent=1 // pred_check_branch
      %53 = sbr.rel (%p51) target = $region33
    $region32: #{tpu_custom_call.1} parent=1 // pred_region
      %v54 = vld [vmem:[#allocation3] sm:$0xff]
      %v55 = vld [vmem:[#allocation3 + $0x8] sm:$0xff]
      %56 = vadd.xlane.f32.xlu0 %v54
      %v57 = vpop.xlane.xlu0 %56
      %58 = vadd.xlane.f32.xlu0 %v55
      %v59 = vpop.xlane.xlu0 %58
      %v60 = vmul.f32 %v57, 0.03125
      %v61 = vmul.f32 %v59, 0.03125
      %v62 = vsub.f32 %v54, %v60
      %v63 = vsub.f32 %v55, %v61
      %v64 = vlaneseq
      %v65 = vand.u32 %v64, 127
      %vm66 = vcmp.lt.s32.totalorder %v65, 32
      %v67 = vsel %vm66, %v62, 0.0
      %v68 = vsel %vm66, %v63, 0.0
      %v69 = vmul.f32 %v67, %v67
      %v70 = vmul.f32 %v68, %v68
      %71 = vadd.xlane.f32.xlu0 %v69
      %v72 = vpop.xlane.xlu0 %71
      %73 = vadd.xlane.f32.xlu0 %v70
      %v74 = vpop.xlane.xlu0 %73
      %v75 = vmul.f32 %v72, 0.032258064
      %v76 = vmul.f32 %v74, 0.032258064
      %v77 = vrsqrt.pop %v75
      %v78 = vmul.f32 %v75, %v77
      %vm79 = vcmp.eq.f32.partialorder %v75, inf
      %v80 = vsel %vm79, %v75, %v78
      %vm81 = vcmp.eq.f32.partialorder %v75, 0.0
      %v82 = vand.u32 %v75, 2147483648
      %v83 = vsel %vm81, %v82, %v80
      %v84 = vrsqrt.pop %v76
      %v85 = vmul.f32 %v76, %v84
      %vm86 = vcmp.eq.f32.partialorder %v76, inf
      %v87 = vsel %vm86, %v76, %v85
      %vm88 = vcmp.eq.f32.partialorder %v76, 0.0
      %v89 = vand.u32 %v76, 2147483648
      %v90 = vsel %vm88, %v89, %v87
      %v91 = vadd.f32 %v83, 1e-06
      %v92 = vadd.f32 %v90, 1e-06
      %v93 = vrcp.pop %v91
      %v94 = vrcp.pop %v92
      %v95 = vld [vmem:[%s1] sm:$0x1]
      %v97 = vlaneseq
      %v98 = vshrl.u32 %v97, 7
      %v99 = vsub.s32 0, %v98
      %v100 = vrot.slane %v95, %v99
      %v102 = vmul.f32 %v100, %v67
      %v103 = vmul.f32 %v100, %v68
      %v104 = vmul.f32 %v102, %v93
      %v105 = vmul.f32 %v103, %v94
      %v106 = vld [vmem:[%s2] sm:$0x1]
      %v108 = vlaneseq
      %v109 = vshrl.u32 %v108, 7
      %v110 = vsub.s32 0, %v109
      %v111 = vrot.slane %v106, %v110
      %v113 = vadd.f32 %v104, %v111
      %v114 = vadd.f32 %v105, %v111
      %v115 = vpack.c.bf16 %v114, %v113
      %v117 = vunpack.c.l.b16 %v115
      %v118 = vunpack.c.h.b16 %v115
      %v119 = vpack.c.b16 %v117, %v117
      %v120 = vpack.c.b16 %v118, %v118
      %123 = vst [vmem:[#allocation2] sm:$0xf] %v119
      %124 = vst [vmem:[#allocation2 + $0x4] sm:$0xf] %v120
    $region33: #{tpu_custom_call.1} parent=1 // pred_fallthru
      _
    %v125 = vld [vmem:[#allocation2] sm:$0xf]
    %v126 = vld [vmem:[#allocation2 + $0x4] sm:$0xf]
    %v127 = vld [vmem:[#allocation6] sm:$0xf]
    %v128 = vld [vmem:[#allocation6 + $0x4] sm:$0xf]
    %v129 = vld [vmem:[#allocation6 + $0x8] sm:$0xf]
    %v130 = vld [vmem:[#allocation6 + $0xc] sm:$0xf]
    %v131 = vld [vmem:[#allocation6 + $0x10] sm:$0xf]
    %v132 = vld [vmem:[#allocation6 + $0x14] sm:$0xf]
    %v133 = vld [vmem:[#allocation6 + $0x18] sm:$0xf]
    %v134 = vld [vmem:[#allocation6 + $0x1c] sm:$0xf]
    %v135 = vld [vmem:[#allocation6 + $0x20] sm:$0xf]
    %v136 = vld [vmem:[#allocation6 + $0x24] sm:$0xf]
    %v137 = vld [vmem:[#allocation6 + $0x28] sm:$0xf]
    %v138 = vld [vmem:[#allocation6 + $0x2c] sm:$0xf]
    %v139 = vld [vmem:[#allocation6 + $0x30] sm:$0xf]
    %v140 = vld [vmem:[#allocation6 + $0x34] sm:$0xf]
    %v141 = vld [vmem:[#allocation6 + $0x38] sm:$0xf]
    %v142 = vld [vmem:[#allocation6 + $0x3c] sm:$0xf]
    %v143 = vld [vmem:[%s4] sm:$0x1]
    %v145 = vlaneseq
    %v146 = vshrl.u32 %v145, 7
    %v147 = vsub.s32 0, %v146
    %v148 = vrot.slane %v143, %v147
    %v152 = vunpack.c.l.b16 %v125
    %v153 = vunpack.c.l.b16 %v126
    %v154 = vpack.c.b16 %v153, %v152
    %v172 = vunpack.c.l.b16 %v127
    %v173 = vunpack.c.l.b16 %v128
    %v174 = vunpack.c.l.b16 %v129
    %v175 = vunpack.c.l.b16 %v130
    %v176 = vunpack.c.l.b16 %v131
    %v177 = vunpack.c.l.b16 %v132
    %v178 = vunpack.c.l.b16 %v133
    %v179 = vunpack.c.l.b16 %v134
    %v180 = vunpack.c.l.b16 %v135
    %v181 = vunpack.c.l.b16 %v136
    %v182 = vunpack.c.l.b16 %v137
    %v183 = vunpack.c.l.b16 %v138
    %v184 = vunpack.c.l.b16 %v139
    %v185 = vunpack.c.l.b16 %v140
    %v186 = vunpack.c.l.b16 %v141
    %v187 = vunpack.c.l.b16 %v142
    %v188 = vpack.c.b16 %v173, %v172
    %v189 = vpack.c.b16 %v175, %v174
    %v190 = vpack.c.b16 %v177, %v176
    %v191 = vpack.c.b16 %v179, %v178
    %v192 = vpack.c.b16 %v181, %v180
    %v193 = vpack.c.b16 %v183, %v182
    %v194 = vpack.c.b16 %v185, %v184
    %v195 = vpack.c.b16 %v187, %v186
    %204 = vmatprep.subr.bf16.mxu0 0
    %205 = vmatpush1.bf16.msra.mxu0 %v195
    %206 = vmatprep.subr.bf16.mxu0 0
    %207 = vmatpush1.bf16.msra.mxu0 %v194
    %208 = vmatprep.subr.bf16.mxu0 0
    %209 = vmatpush1.bf16.msra.mxu0 %v193
    %210 = vmatprep.subr.bf16.mxu0 0
    %211 = vmatpush1.bf16.msra.mxu0 %v192
    %212 = vmatprep.subr.bf16.mxu0 0
    %213 = vmatpush1.bf16.msra.mxu0 %v191
    %214 = vmatprep.subr.bf16.mxu0 0
    %215 = vmatpush1.bf16.msra.mxu0 %v190
    %216 = vmatprep.subr.bf16.mxu0 0
    %217 = vmatpush1.bf16.msra.mxu0 %v189
    %218 = vmatprep.subr.bf16.mxu0 0
    %219 = vmatpush1.bf16.msra.mxu0 %v188
    %220 = vmatprep.subr.bf16.mxu0 0
    %221 = vmatpush2.bf16.msra.mxu0 0
    %222 = vmatprep.subr.bf16.mxu0 0
    %223 = vmatpush2.bf16.msra.mxu0 0
    %224 = vmatprep.subr.bf16.mxu0 0
    %225 = vmatpush2.bf16.msra.mxu0 0
    %226 = vmatprep.subr.bf16.mxu0 0
    %227 = vmatpush2.bf16.msra.mxu0 0
    %228 = vmatprep.subr.bf16.mxu0 0
    %229 = vmatpush2.bf16.msra.mxu0 0
    %230 = vmatprep.subr.bf16.mxu0 0
    %231 = vmatpush2.bf16.msra.mxu0 0
    %232 = vmatprep.subr.bf16.mxu0 0
    %233 = vmatpush2.bf16.msra.mxu0 0
    %234 = vmatprep.subr.bf16.mxu0 0
    %235 = vmatpush2.bf16.msra.mxu0 0
    %236 = vmatprep.mubr.bf16.mxu0 0
    %237 = vmatmul.mubr.bf16.gmra.mxu0 %v154
    %v238 = vpop.f32.mrf.mxu0
    %v239 = vadd.f32 %v148, %v238
    %v240 = vpop.f32.mrf.mxu0
    %v241 = vpop.f32.mrf.mxu0
    %v242 = vadd.f32 %v148, %v241
    %v243 = vpop.f32.mrf.mxu0
    %244 = vdwg.mxu0
    %v245 = vld [vmem:[#allocation3] sm:$0xff]
    %v246 = vld [vmem:[#allocation3 + $0x8] sm:$0xff]
    %v247 = vadd.f32 %v245, %v239
    %v248 = vadd.f32 %v246, %v242
    %249 = vst [vmem:[#allocation8] sm:$0xff] %v247
    %250 = vst [vmem:[#allocation8 + $0x8] sm:$0xff] %v248
    // Predicated region
    $region34: #{tpu_custom_call.1} parent=1 // pred_check
      _
    $region35: #{tpu_custom_call.1} parent=1 // pred_check_branch
      %252 = sbr.rel (0) target = $region37
    $region36: #{tpu_custom_call.1} parent=1 // pred_region
      %s254 = ssub.s32 256, 256
      %255 = vsyncadd [#allocation5], %s254
      %s256 = sshll.u32 [#allocation8], 4
      %s257 = int_to_ptr.vmem [resolvable:$true] %s256
      %262 = dma.vmem_to_hbm [thread:$0]  %s257, 256, %s5, [#allocation5], 128, 128, 8
    $region37: #{tpu_custom_call.1} parent=1 // pred_fallthru
      _
    // Predicated region
    $region38: #{tpu_custom_call.1} parent=1 // pred_check
      _
    $region39: #{tpu_custom_call.1} parent=1 // pred_check_branch
      %264 = sbr.rel (0) target = $region41
    $region40: #{tpu_custom_call.1} parent=1 // pred_region
      %265 = dma.done [#allocation5], 256
    $region41: #{tpu_custom_call.1} parent=1 // pred_fallthru
      _
    %266 = vsyncpa [#allocation4], 1
    %267 = vsyncpa [#allocation7], 1
    %268 = vsyncpa [#allocation5], 1

</llo_original>
